<compile_context>
chip_gen: v6e
topology: v6e:2x2x1
jax: 0.10.0
libtpu: 0.0.40
codegen_flags: <defaults>
</compile_context>

<pallas_src>
import jax
import jax.numpy as jnp
from jax.experimental import pallas as pl
from jax.experimental.pallas import tpu as pltpu


def _sigmoid(t):
    return 1.0 / (1.0 + jnp.exp(-t))


def _default_vmem_limit():
    """~100 MiB on 128-MiB parts (v5e/v6e), ~48 MiB on v7x (64 MiB/TC)."""
    cap = 64 * 1024 * 1024
    try:
        info = pltpu.get_tpu_info()
        cap = int(getattr(info, "vmem_capacity_bytes", cap))
    except Exception:
        pass
    return max(32 * 1024 * 1024, min(cap - 16 * 1024 * 1024, 100 * 1024 * 1024))


def _ta_fused_kernel(x_ref, wch_ref, bch_ref, wsp_ref, bsp_ref, para_ref,
                     o_ref, v_scr):
    """Fused per-batch-element TA forward.

    x_ref:    (C, H, W)  VMEM   input features (batch dim squeezed)
    wch_ref:  (C, C)     VMEM   channel_conv weight (f32)
    bch_ref:  (C, 1)     VMEM   channel_conv bias   (f32)
    wsp_ref:  (C, 1)     VMEM   spatial_conv weight (f32)
    bsp_ref:  (1,)       SMEM   spatial_conv bias   (f32 scalar)
    para_ref: (1,)       SMEM   learned scalar `para` (f32)
    o_ref:    (C, H, W)  VMEM   output
    v_scr:    (C, 1)     VMEM   scratch holding v = Wc @ Mc
    """
    C, H, W = x_ref.shape
    inv_hw = 1.0 / float(H * W)
    unroll = bool(C <= 8)

    bsp = bsp_ref[0]
    para = para_ref[0]

    # ---- pass 1 over channels (f32 accumulation, one (H,W) tile live) ------
    # produces: conv = spatial 1x1 conv of x (H,W);  fc = per-channel mean (C,1)
    def pass1(c, carry):
        conv_acc, fc_acc = carry
        xc = x_ref[c].astype(jnp.float32)                         # (H, W)
        wc = wsp_ref[pl.ds(c, 1), :]                              # (1, 1)
        conv_acc = conv_acc + xc * wc
        ch_mean = jnp.sum(jnp.sum(xc, axis=1, keepdims=True),
                          axis=0, keepdims=True) * inv_hw         # (1, 1)
        onehot = jax.lax.broadcasted_iota(jnp.int32, (C, 1), 0) == c
        fc_acc = fc_acc + jnp.where(onehot, ch_mean, 0.0)         # (C, 1)
        return conv_acc, fc_acc

    conv, fc = jax.lax.fori_loop(
        0, C, pass1,
        (jnp.zeros((H, W), jnp.float32), jnp.zeros((C, 1), jnp.float32)),
        unroll=unroll)
    conv = conv + bsp                                             # (H, W)

    # ---- channel-attention chain: tiny (C,C)@(C,1) matvecs on the MXU ------
    w = wch_ref[...].astype(jnp.float32)                          # (C, C)
    b = bch_ref[...].astype(jnp.float32)                          # (C, 1)
    mbarc = jnp.dot(w, fc, preferred_element_type=jnp.float32) + b
    mc = _sigmoid(fc - mbarc) * fc                                # (C, 1)
    # v = Wc @ Mc (channel_conv bias is applied in the epilogue)
    v_scr[...] = jnp.dot(w, mc, preferred_element_type=jnp.float32)

    # ---- spatial attention --------------------------------------------------
    rmax = jnp.max(conv, axis=1, keepdims=True)                   # (H, 1) max over W
    cmax = jnp.max(conv, axis=0, keepdims=True)                   # (1, W) max over H
    gmax = jnp.max(cmax, axis=1, keepdims=True)                   # (1, 1) global max
    mbars = para * gmax
    mh = _sigmoid(rmax - mbars) * rmax                            # (H, 1)
    mw = _sigmoid(cmax - mbars) * cmax                            # (1, W)
    ms = mh + mw                                                  # (H, W) = Mw + Mh^T

    # ---- fused epilogue:  relu(channel_conv(Mc*Ms)) + x
    #      == relu(v[c]*Ms + bch[c]) + x   (exact: Mc is spatially constant) --
    def pass2(c, carry):
        vc = v_scr[pl.ds(c, 1), :]                                # (1, 1)
        bc = bch_ref[pl.ds(c, 1), :].astype(jnp.float32)          # (1, 1)
        xc = x_ref[c].astype(jnp.float32)                         # (H, W)
        yc = jnp.maximum(vc * ms + bc, 0.0) + xc
        o_ref[c] = yc.astype(o_ref.dtype)
        return carry

    jax.lax.fori_loop(0, C, pass2, 0, unroll=unroll)


def ta_forward(x, w_ch, b_ch, w_sp, b_sp, para, *, donate_x=False,
               vmem_limit_bytes=None):
    """Pallas forward pass of `TA`.

    x:    (B, C, H, W)
    w_ch: (C, C, 1, 1), b_ch: (C,)   -- channel_conv parameters
    w_sp: (1, C, 1, 1), b_sp: (1,)   -- spatial_conv parameters
    para: (1,)
    donate_x: alias x with the output (only if the caller donates x).
    """
    B, C, H, W = x.shape
    dt = x.dtype
    wch = w_ch.reshape(C, C).astype(jnp.float32)
    bch = b_ch.reshape(C, 1).astype(jnp.float32)
    wsp = w_sp.reshape(C, 1).astype(jnp.float32)
    bsp = b_sp.reshape(1).astype(jnp.float32)
    par = para.reshape(1).astype(jnp.float32)

    if vmem_limit_bytes is None:
        vmem_limit_bytes = _default_vmem_limit()

    grid_spec = pltpu.PrefetchScalarGridSpec(
        num_scalar_prefetch=0,
        grid=(B,),
        in_specs=[
            pl.BlockSpec((None, C, H, W), lambda b: (b, 0, 0, 0)),   # x (native NCHW)
            pl.BlockSpec((C, C), lambda b: (0, 0)),                  # channel weight
            pl.BlockSpec((C, 1), lambda b: (0, 0)),                  # channel bias
            pl.BlockSpec((C, 1), lambda b: (0, 0)),                  # spatial weight
            pl.BlockSpec(memory_space=pltpu.MemorySpace.SMEM),       # spatial bias
            pl.BlockSpec(memory_space=pltpu.MemorySpace.SMEM),       # para
        ],
        out_specs=pl.BlockSpec((None, C, H, W), lambda b: (b, 0, 0, 0)),
        scratch_shapes=[pltpu.VMEM((C, 1), jnp.float32)],
    )

    return pl.pallas_call(
        _ta_fused_kernel,
        out_shape=jax.ShapeDtypeStruct((B, C, H, W), dt),
        grid_spec=grid_spec,
        compiler_params=pltpu.CompilerParams(
            dimension_semantics=("parallel",),
            vmem_limit_bytes=int(vmem_limit_bytes),
        ),
        input_output_aliases=({0: 0} if donate_x else {}),
    )(x, wch, bch, wsp, bsp, par)


def ta_reference(x, w_ch, b_ch, w_sp, b_sp, para):
    """Pure-jnp literal translation of the PyTorch forward (for verification)."""
    B, C, H, W = x.shape
    wc = w_ch.reshape(C, C)
    ws = w_sp.reshape(C)
    fc = jnp.mean(x, axis=(2, 3), keepdims=True)                        # (B,C,1,1)
    mbarc = jnp.einsum("oc,bcij->boij", wc, fc) + b_ch.reshape(1, C, 1, 1)
    mc = jax.nn.sigmoid(fc - mbarc) * fc                                # (B,C,1,1)
    conv_x = jnp.einsum("c,bchw->bhw", ws, x)[:, None] + b_sp.reshape(1, 1, 1, 1)
    fs1 = jnp.swapaxes(jnp.max(conv_x, axis=3, keepdims=True), 2, 3)    # (B,1,1,H)
    fs2 = jnp.max(conv_x, axis=2, keepdims=True)                        # (B,1,1,W)
    fs = jnp.concatenate([fs1, fs2], axis=3)                            # (B,1,1,H+W)
    mbars = para * jnp.max(fs, axis=3, keepdims=True)                   # (B,1,1,1)
    sa = jax.nn.sigmoid(fs - mbars) * fs
    mh, mw = sa[..., :H], sa[..., H:]
    ms = mw + jnp.swapaxes(mh, 2, 3)                                    # (B,1,H,W)
    y = jnp.einsum("oc,bchw->bohw", wc, mc * ms) + b_ch.reshape(1, C, 1, 1)
    return jax.nn.relu(y) + x


if __name__ == "__main__":
    key = jax.random.PRNGKey(0)
    kx, k1, k2, k3, k4 = jax.random.split(key, 5)
    B, C, H, W = 2, 4, 16, 16
    x = jax.random.normal(kx, (B, C, H, W), jnp.float32)
    w_ch = jax.random.normal(k1, (C, C, 1, 1), jnp.float32) * 0.5
    b_ch = jax.random.normal(k2, (C,), jnp.float32) * 0.1
    w_sp = jax.random.normal(k3, (1, C, 1, 1), jnp.float32) * 0.5
    b_sp = jax.random.normal(k4, (1,), jnp.float32) * 0.1
    para = jnp.ones((1,), jnp.float32)   # nn.Parameter(torch.ones(1))

    out = jax.jit(ta_forward)(x, w_ch, b_ch, w_sp, b_sp, para)
    out = jax.block_until_ready(out)

    ref = ta_reference(x, w_ch, b_ch, w_sp, b_sp, para)
    assert out.shape == (B, C, H, W)
    err = float(jnp.max(jnp.abs(out - ref)))
    assert jnp.allclose(out, ref, atol=1e-4, rtol=1e-4), err
    print("KERNEL_OK")
</pallas_src>

<mosaic_0001>
module attributes {stable_mosaic.version = 11 : i64} {
  func.func @_ta_fused_kernel(%arg0: i32, %arg1: memref<1x4x16x16xf32, #tpu.memory_space<vmem>>, %arg2: memref<4x4xf32, #tpu.memory_space<vmem>>, %arg3: memref<4x1xf32, #tpu.memory_space<vmem>>, %arg4: memref<4x1xf32, #tpu.memory_space<vmem>>, %arg5: memref<1xf32, #tpu.memory_space<smem>>, %arg6: memref<1xf32, #tpu.memory_space<smem>>, %arg7: memref<1x4x16x16xf32, #tpu.memory_space<vmem>>, %arg8: memref<4x1xf32, #tpu.memory_space<vmem>>) attributes {dimension_semantics = [#tpu.dimension_semantics<parallel>], iteration_bounds = array<i64: 2>, scalar_prefetch = 0 : i64, scratch_operands = 1 : i64, tpu.core_type = #tpu.core_type<tc>, window_params = [{transform_indices = @transform_0, window_bounds = array<i64: 1, 4, 16, 16>}, {pipeline_mode = #tpu.pipeline_mode<synchronous>, transform_indices = @transform_1, window_bounds = array<i64: 4, 4>}, {pipeline_mode = #tpu.pipeline_mode<synchronous>, transform_indices = @transform_2, window_bounds = array<i64: 4, 1>}, {pipeline_mode = #tpu.pipeline_mode<synchronous>, transform_indices = @transform_3, window_bounds = array<i64: 4, 1>}, {transform_indices = @transform_4, window_bounds = array<i64: 1>}, {transform_indices = @transform_5, window_bounds = array<i64: 1>}, {transform_indices = @transform_6, window_bounds = array<i64: 1, 4, 16, 16>}]} {
    %c0 = arith.constant 0 : index
    %0 = memref.load %arg5[%c0] : memref<1xf32, #tpu.memory_space<smem>>
    %c0_0 = arith.constant 0 : index
    %1 = memref.load %arg6[%c0_0] : memref<1xf32, #tpu.memory_space<smem>>
    %cst = arith.constant 0.000000e+00 : f32
    %2 = vector.broadcast %cst : f32 to vector<16x16xf32>
    %cst_1 = arith.constant 0.000000e+00 : f32
    %3 = vector.broadcast %cst_1 : f32 to vector<4x1xf32>
    %c0_i32 = arith.constant 0 : i32
    %c0_2 = arith.constant 0 : index
    %4 = arith.index_cast %c0_i32 : i32 to index
    %c0_3 = arith.constant 0 : index
    %c0_4 = arith.constant 0 : index
    %5 = vector.load %arg1[%c0_2, %4, %c0_3, %c0_4] : memref<1x4x16x16xf32, #tpu.memory_space<vmem>>, vector<1x1x16x16xf32>
    %6 = vector.shape_cast %5 : vector<1x1x16x16xf32> to vector<16x16xf32>
    %7 = arith.index_cast %c0_i32 : i32 to index
    %c0_5 = arith.constant 0 : index
    %8 = vector.load %arg4[%7, %c0_5] : memref<4x1xf32, #tpu.memory_space<vmem>>, vector<1x1xf32>
    %9 = vector.broadcast %8 : vector<1x1xf32> to vector<16x16xf32>
    %10 = arith.mulf %6, %9 : vector<16x16xf32>
    %11 = arith.addf %2, %10 : vector<16x16xf32>
    %cst_6 = arith.constant dense<0.000000e+00> : vector<16xf32>
    %12 = vector.multi_reduction <add>, %6, %cst_6 [1] : vector<16x16xf32> to vector<16xf32>
    %13 = vector.shape_cast %12 : vector<16xf32> to vector<16x1xf32>
    %cst_7 = arith.constant dense<0.000000e+00> : vector<1xf32>
    %14 = vector.multi_reduction <add>, %13, %cst_7 [0] : vector<16x1xf32> to vector<1xf32>
    %15 = vector.shape_cast %14 : vector<1xf32> to vector<1x1xf32>
    %cst_8 = arith.constant 3.906250e-03 : f32
    %16 = vector.broadcast %cst_8 : f32 to vector<1x1xf32>
    %17 = arith.mulf %15, %16 : vector<1x1xf32>
    %18 = tpu.iota {dimensions = array<i32: 0>} : vector<4x1xi32>
    %19 = vector.broadcast %c0_i32 : i32 to vector<4x1xi32>
    %20 = arith.cmpi eq, %18, %19 : vector<4x1xi32>
    %cst_9 = arith.constant 0.000000e+00 : f32
    %21 = vector.shape_cast %17 : vector<1x1xf32> to vector<1x1xf32>
    %22 = vector.broadcast %21 : vector<1x1xf32> to vector<4x1xf32>
    %23 = vector.broadcast %cst_9 : f32 to vector<4x1xf32>
    %24 = arith.select %20, %22, %23 : vector<4x1xi1>, vector<4x1xf32>
    %25 = arith.addf %3, %24 : vector<4x1xf32>
    %c1_i32 = arith.constant 1 : i32
    %c0_10 = arith.constant 0 : index
    %26 = arith.index_cast %c1_i32 : i32 to index
    %c0_11 = arith.constant 0 : index
    %c0_12 = arith.constant 0 : index
    %27 = vector.load %arg1[%c0_10, %26, %c0_11, %c0_12] : memref<1x4x16x16xf32, #tpu.memory_space<vmem>>, vector<1x1x16x16xf32>
    %28 = vector.shape_cast %27 : vector<1x1x16x16xf32> to vector<16x16xf32>
    %29 = arith.index_cast %c1_i32 : i32 to index
    %c0_13 = arith.constant 0 : index
    %30 = vector.load %arg4[%29, %c0_13] : memref<4x1xf32, #tpu.memory_space<vmem>>, vector<1x1xf32>
    %31 = vector.broadcast %30 : vector<1x1xf32> to vector<16x16xf32>
    %32 = arith.mulf %28, %31 : vector<16x16xf32>
    %33 = arith.addf %11, %32 : vector<16x16xf32>
    %cst_14 = arith.constant dense<0.000000e+00> : vector<16xf32>
    %34 = vector.multi_reduction <add>, %28, %cst_14 [1] : vector<16x16xf32> to vector<16xf32>
    %35 = vector.shape_cast %34 : vector<16xf32> to vector<16x1xf32>
    %cst_15 = arith.constant dense<0.000000e+00> : vector<1xf32>
    %36 = vector.multi_reduction <add>, %35, %cst_15 [0] : vector<16x1xf32> to vector<1xf32>
    %37 = vector.shape_cast %36 : vector<1xf32> to vector<1x1xf32>
    %cst_16 = arith.constant 3.906250e-03 : f32
    %38 = vector.broadcast %cst_16 : f32 to vector<1x1xf32>
    %39 = arith.mulf %37, %38 : vector<1x1xf32>
    %40 = tpu.iota {dimensions = array<i32: 0>} : vector<4x1xi32>
    %41 = vector.broadcast %c1_i32 : i32 to vector<4x1xi32>
    %42 = arith.cmpi eq, %40, %41 : vector<4x1xi32>
    %cst_17 = arith.constant 0.000000e+00 : f32
    %43 = vector.shape_cast %39 : vector<1x1xf32> to vector<1x1xf32>
    %44 = vector.broadcast %43 : vector<1x1xf32> to vector<4x1xf32>
    %45 = vector.broadcast %cst_17 : f32 to vector<4x1xf32>
    %46 = arith.select %42, %44, %45 : vector<4x1xi1>, vector<4x1xf32>
    %47 = arith.addf %25, %46 : vector<4x1xf32>
    %c2_i32 = arith.constant 2 : i32
    %c0_18 = arith.constant 0 : index
    %48 = arith.index_cast %c2_i32 : i32 to index
    %c0_19 = arith.constant 0 : index
    %c0_20 = arith.constant 0 : index
    %49 = vector.load %arg1[%c0_18, %48, %c0_19, %c0_20] : memref<1x4x16x16xf32, #tpu.memory_space<vmem>>, vector<1x1x16x16xf32>
    %50 = vector.shape_cast %49 : vector<1x1x16x16xf32> to vector<16x16xf32>
    %51 = arith.index_cast %c2_i32 : i32 to index
    %c0_21 = arith.constant 0 : index
    %52 = vector.load %arg4[%51, %c0_21] : memref<4x1xf32, #tpu.memory_space<vmem>>, vector<1x1xf32>
    %53 = vector.broadcast %52 : vector<1x1xf32> to vector<16x16xf32>
    %54 = arith.mulf %50, %53 : vector<16x16xf32>
    %55 = arith.addf %33, %54 : vector<16x16xf32>
    %cst_22 = arith.constant dense<0.000000e+00> : vector<16xf32>
    %56 = vector.multi_reduction <add>, %50, %cst_22 [1] : vector<16x16xf32> to vector<16xf32>
    %57 = vector.shape_cast %56 : vector<16xf32> to vector<16x1xf32>
    %cst_23 = arith.constant dense<0.000000e+00> : vector<1xf32>
    %58 = vector.multi_reduction <add>, %57, %cst_23 [0] : vector<16x1xf32> to vector<1xf32>
    %59 = vector.shape_cast %58 : vector<1xf32> to vector<1x1xf32>
    %cst_24 = arith.constant 3.906250e-03 : f32
    %60 = vector.broadcast %cst_24 : f32 to vector<1x1xf32>
    %61 = arith.mulf %59, %60 : vector<1x1xf32>
    %62 = tpu.iota {dimensions = array<i32: 0>} : vector<4x1xi32>
    %63 = vector.broadcast %c2_i32 : i32 to vector<4x1xi32>
    %64 = arith.cmpi eq, %62, %63 : vector<4x1xi32>
    %cst_25 = arith.constant 0.000000e+00 : f32
    %65 = vector.shape_cast %61 : vector<1x1xf32> to vector<1x1xf32>
    %66 = vector.broadcast %65 : vector<1x1xf32> to vector<4x1xf32>
    %67 = vector.broadcast %cst_25 : f32 to vector<4x1xf32>
    %68 = arith.select %64, %66, %67 : vector<4x1xi1>, vector<4x1xf32>
    %69 = arith.addf %47, %68 : vector<4x1xf32>
    %c3_i32 = arith.constant 3 : i32
    %c0_26 = arith.constant 0 : index
    %70 = arith.index_cast %c3_i32 : i32 to index
    %c0_27 = arith.constant 0 : index
    %c0_28 = arith.constant 0 : index
    %71 = vector.load %arg1[%c0_26, %70, %c0_27, %c0_28] : memref<1x4x16x16xf32, #tpu.memory_space<vmem>>, vector<1x1x16x16xf32>
    %72 = vector.shape_cast %71 : vector<1x1x16x16xf32> to vector<16x16xf32>
    %73 = arith.index_cast %c3_i32 : i32 to index
    %c0_29 = arith.constant 0 : index
    %74 = vector.load %arg4[%73, %c0_29] : memref<4x1xf32, #tpu.memory_space<vmem>>, vector<1x1xf32>
    %75 = vector.broadcast %74 : vector<1x1xf32> to vector<16x16xf32>
    %76 = arith.mulf %72, %75 : vector<16x16xf32>
    %77 = arith.addf %55, %76 : vector<16x16xf32>
    %cst_30 = arith.constant dense<0.000000e+00> : vector<16xf32>
    %78 = vector.multi_reduction <add>, %72, %cst_30 [1] : vector<16x16xf32> to vector<16xf32>
    %79 = vector.shape_cast %78 : vector<16xf32> to vector<16x1xf32>
    %cst_31 = arith.constant dense<0.000000e+00> : vector<1xf32>
    %80 = vector.multi_reduction <add>, %79, %cst_31 [0] : vector<16x1xf32> to vector<1xf32>
    %81 = vector.shape_cast %80 : vector<1xf32> to vector<1x1xf32>
    %cst_32 = arith.constant 3.906250e-03 : f32
    %82 = vector.broadcast %cst_32 : f32 to vector<1x1xf32>
    %83 = arith.mulf %81, %82 : vector<1x1xf32>
    %84 = tpu.iota {dimensions = array<i32: 0>} : vector<4x1xi32>
    %85 = vector.broadcast %c3_i32 : i32 to vector<4x1xi32>
    %86 = arith.cmpi eq, %84, %85 : vector<4x1xi32>
    %cst_33 = arith.constant 0.000000e+00 : f32
    %87 = vector.shape_cast %83 : vector<1x1xf32> to vector<1x1xf32>
    %88 = vector.broadcast %87 : vector<1x1xf32> to vector<4x1xf32>
    %89 = vector.broadcast %cst_33 : f32 to vector<4x1xf32>
    %90 = arith.select %86, %88, %89 : vector<4x1xi1>, vector<4x1xf32>
    %91 = arith.addf %69, %90 : vector<4x1xf32>
    %c4_i32 = arith.constant 4 : i32
    %92 = vector.broadcast %0 : f32 to vector<16x16xf32>
    %93 = arith.addf %77, %92 : vector<16x16xf32>
    %c0_34 = arith.constant 0 : index
    %c0_35 = arith.constant 0 : index
    %94 = vector.load %arg2[%c0_34, %c0_35] : memref<4x4xf32, #tpu.memory_space<vmem>>, vector<4x4xf32>
    %c0_36 = arith.constant 0 : index
    %c0_37 = arith.constant 0 : index
    %95 = vector.load %arg3[%c0_36, %c0_37] : memref<4x1xf32, #tpu.memory_space<vmem>>, vector<4x1xf32>
    %cst_38 = arith.constant dense<0.000000e+00> : vector<4x1xf32>
    %96 = tpu.matmul %94, %91, %cst_38 {dimension_numbers = #tpu.dot_dimension_numbers<[1], [0], [0], [1], [0, 0, 1, 1], [], []>} : vector<4x4xf32>, vector<4x1xf32>, vector<4x1xf32> -> vector<4x1xf32>
    %97 = arith.addf %96, %95 : vector<4x1xf32>
    %98 = arith.subf %91, %97 : vector<4x1xf32>
    %cst_39 = arith.constant 0.000000e+00 : f32
    %99 = vector.broadcast %cst_39 : f32 to vector<4x1xf32>
    %100 = arith.subf %99, %98 : vector<4x1xf32>
    %101 = math.exp %100 : vector<4x1xf32>
    %cst_40 = arith.constant 1.000000e+00 : f32
    %102 = vector.broadcast %cst_40 : f32 to vector<4x1xf32>
    %103 = arith.addf %102, %101 : vector<4x1xf32>
    %cst_41 = arith.constant 1.000000e+00 : f32
    %104 = vector.broadcast %cst_41 : f32 to vector<4x1xf32>
    %105 = arith.divf %104, %103 : vector<4x1xf32>
    %106 = arith.mulf %105, %91 : vector<4x1xf32>
    %cst_42 = arith.constant dense<0.000000e+00> : vector<4x1xf32>
    %107 = tpu.matmul %94, %106, %cst_42 {dimension_numbers = #tpu.dot_dimension_numbers<[1], [0], [0], [1], [0, 0, 1, 1], [], []>} : vector<4x4xf32>, vector<4x1xf32>, vector<4x1xf32> -> vector<4x1xf32>
    %c0_43 = arith.constant 0 : index
    %c0_44 = arith.constant 0 : index
    %108 = vector.load %arg8[%c0_43, %c0_44] : memref<4x1xf32, #tpu.memory_space<vmem>>, vector<4x1xf32>
    tpu.vector_store %arg8[%c0_43, %c0_44], %107 {strides = array<i32>} : memref<4x1xf32, #tpu.memory_space<vmem>>, vector<4x1xf32>,
    %cst_45 = arith.constant dense<0xFF800000> : vector<16xf32>
    %109 = vector.multi_reduction <maximumf>, %93, %cst_45 [1] : vector<16x16xf32> to vector<16xf32>
    %110 = vector.shape_cast %109 : vector<16xf32> to vector<16x1xf32>
    %cst_46 = arith.constant dense<0xFF800000> : vector<16xf32>
    %111 = vector.multi_reduction <maximumf>, %93, %cst_46 [0] : vector<16x16xf32> to vector<16xf32>
    %112 = vector.shape_cast %111 : vector<16xf32> to vector<1x16xf32>
    %cst_47 = arith.constant dense<0xFF800000> : vector<1xf32>
    %113 = vector.multi_reduction <maximumf>, %112, %cst_47 [1] : vector<1x16xf32> to vector<1xf32>
    %114 = vector.shape_cast %113 : vector<1xf32> to vector<1x1xf32>
    %115 = vector.broadcast %1 : f32 to vector<1x1xf32>
    %116 = arith.mulf %115, %114 : vector<1x1xf32>
    %117 = vector.broadcast %116 : vector<1x1xf32> to vector<16x1xf32>
    %118 = arith.subf %110, %117 : vector<16x1xf32>
    %cst_48 = arith.constant 0.000000e+00 : f32
    %119 = vector.broadcast %cst_48 : f32 to vector<16x1xf32>
    %120 = arith.subf %119, %118 : vector<16x1xf32>
    %121 = math.exp %120 : vector<16x1xf32>
    %cst_49 = arith.constant 1.000000e+00 : f32
    %122 = vector.broadcast %cst_49 : f32 to vector<16x1xf32>
    %123 = arith.addf %122, %121 : vector<16x1xf32>
    %cst_50 = arith.constant 1.000000e+00 : f32
    %124 = vector.broadcast %cst_50 : f32 to vector<16x1xf32>
    %125 = arith.divf %124, %123 : vector<16x1xf32>
    %126 = arith.mulf %125, %110 : vector<16x1xf32>
    %127 = vector.broadcast %116 : vector<1x1xf32> to vector<1x16xf32>
    %128 = arith.subf %112, %127 : vector<1x16xf32>
    %cst_51 = arith.constant 0.000000e+00 : f32
    %129 = vector.broadcast %cst_51 : f32 to vector<1x16xf32>
    %130 = arith.subf %129, %128 : vector<1x16xf32>
    %131 = math.exp %130 : vector<1x16xf32>
    %cst_52 = arith.constant 1.000000e+00 : f32
    %132 = vector.broadcast %cst_52 : f32 to vector<1x16xf32>
    %133 = arith.addf %132, %131 : vector<1x16xf32>
    %cst_53 = arith.constant 1.000000e+00 : f32
    %134 = vector.broadcast %cst_53 : f32 to vector<1x16xf32>
    %135 = arith.divf %134, %133 : vector<1x16xf32>
    %136 = arith.mulf %135, %112 : vector<1x16xf32>
    %137 = vector.broadcast %126 : vector<16x1xf32> to vector<16x16xf32>
    %138 = vector.broadcast %136 : vector<1x16xf32> to vector<16x16xf32>
    %139 = arith.addf %137, %138 : vector<16x16xf32>
    %c0_i32_54 = arith.constant 0 : i32
    %140 = arith.index_cast %c0_i32_54 : i32 to index
    %c0_55 = arith.constant 0 : index
    %141 = vector.load %arg8[%140, %c0_55] : memref<4x1xf32, #tpu.memory_space<vmem>>, vector<1x1xf32>
    %142 = arith.index_cast %c0_i32_54 : i32 to index
    %c0_56 = arith.constant 0 : index
    %143 = vector.load %arg3[%142, %c0_56] : memref<4x1xf32, #tpu.memory_space<vmem>>, vector<1x1xf32>
    %c0_57 = arith.constant 0 : index
    %144 = arith.index_cast %c0_i32_54 : i32 to index
    %c0_58 = arith.constant 0 : index
    %c0_59 = arith.constant 0 : index
    %145 = vector.load %arg1[%c0_57, %144, %c0_58, %c0_59] : memref<1x4x16x16xf32, #tpu.memory_space<vmem>>, vector<1x1x16x16xf32>
    %146 = vector.shape_cast %145 : vector<1x1x16x16xf32> to vector<16x16xf32>
    %147 = vector.broadcast %141 : vector<1x1xf32> to vector<16x16xf32>
    %148 = arith.mulf %147, %139 : vector<16x16xf32>
    %149 = vector.broadcast %143 : vector<1x1xf32> to vector<16x16xf32>
    %150 = arith.addf %148, %149 : vector<16x16xf32>
    %cst_60 = arith.constant 0.000000e+00 : f32
    %151 = vector.broadcast %cst_60 : f32 to vector<16x16xf32>
    %152 = arith.maximumf %150, %151 : vector<16x16xf32>
    %153 = arith.addf %152, %146 : vector<16x16xf32>
    %c0_61 = arith.constant 0 : index
    %154 = arith.index_cast %c0_i32_54 : i32 to index
    %c0_62 = arith.constant 0 : index
    %c0_63 = arith.constant 0 : index
    %155 = vector.load %arg7[%c0_61, %154, %c0_62, %c0_63] : memref<1x4x16x16xf32, #tpu.memory_space<vmem>>, vector<1x1x16x16xf32>
    %156 = vector.shape_cast %155 : vector<1x1x16x16xf32> to vector<16x16xf32>
    %157 = vector.shape_cast %153 : vector<16x16xf32> to vector<1x1x16x16xf32>
    tpu.vector_store %arg7[%c0_61, %154, %c0_62, %c0_63], %157 {strides = array<i32>} : memref<1x4x16x16xf32, #tpu.memory_space<vmem>>, vector<1x1x16x16xf32>,
    %c1_i32_64 = arith.constant 1 : i32
    %158 = arith.index_cast %c1_i32_64 : i32 to index
    %c0_65 = arith.constant 0 : index
    %159 = vector.load %arg8[%158, %c0_65] : memref<4x1xf32, #tpu.memory_space<vmem>>, vector<1x1xf32>
    %160 = arith.index_cast %c1_i32_64 : i32 to index
    %c0_66 = arith.constant 0 : index
    %161 = vector.load %arg3[%160, %c0_66] : memref<4x1xf32, #tpu.memory_space<vmem>>, vector<1x1xf32>
    %c0_67 = arith.constant 0 : index
    %162 = arith.index_cast %c1_i32_64 : i32 to index
    %c0_68 = arith.constant 0 : index
    %c0_69 = arith.constant 0 : index
    %163 = vector.load %arg1[%c0_67, %162, %c0_68, %c0_69] : memref<1x4x16x16xf32, #tpu.memory_space<vmem>>, vector<1x1x16x16xf32>
    %164 = vector.shape_cast %163 : vector<1x1x16x16xf32> to vector<16x16xf32>
    %165 = vector.broadcast %159 : vector<1x1xf32> to vector<16x16xf32>
    %166 = arith.mulf %165, %139 : vector<16x16xf32>
    %167 = vector.broadcast %161 : vector<1x1xf32> to vector<16x16xf32>
    %168 = arith.addf %166, %167 : vector<16x16xf32>
    %cst_70 = arith.constant 0.000000e+00 : f32
    %169 = vector.broadcast %cst_70 : f32 to vector<16x16xf32>
    %170 = arith.maximumf %168, %169 : vector<16x16xf32>
    %171 = arith.addf %170, %164 : vector<16x16xf32>
    %c0_71 = arith.constant 0 : index
    %172 = arith.index_cast %c1_i32_64 : i32 to index
    %c0_72 = arith.constant 0 : index
    %c0_73 = arith.constant 0 : index
    %173 = vector.load %arg7[%c0_71, %172, %c0_72, %c0_73] : memref<1x4x16x16xf32, #tpu.memory_space<vmem>>, vector<1x1x16x16xf32>
    %174 = vector.shape_cast %173 : vector<1x1x16x16xf32> to vector<16x16xf32>
    %175 = vector.shape_cast %171 : vector<16x16xf32> to vector<1x1x16x16xf32>
    tpu.vector_store %arg7[%c0_71, %172, %c0_72, %c0_73], %175 {strides = array<i32>} : memref<1x4x16x16xf32, #tpu.memory_space<vmem>>, vector<1x1x16x16xf32>,
    %c2_i32_74 = arith.constant 2 : i32
    %176 = arith.index_cast %c2_i32_74 : i32 to index
    %c0_75 = arith.constant 0 : index
    %177 = vector.load %arg8[%176, %c0_75] : memref<4x1xf32, #tpu.memory_space<vmem>>, vector<1x1xf32>
    %178 = arith.index_cast %c2_i32_74 : i32 to index
    %c0_76 = arith.constant 0 : index
    %179 = vector.load %arg3[%178, %c0_76] : memref<4x1xf32, #tpu.memory_space<vmem>>, vector<1x1xf32>
    %c0_77 = arith.constant 0 : index
    %180 = arith.index_cast %c2_i32_74 : i32 to index
    %c0_78 = arith.constant 0 : index
    %c0_79 = arith.constant 0 : index
    %181 = vector.load %arg1[%c0_77, %180, %c0_78, %c0_79] : memref<1x4x16x16xf32, #tpu.memory_space<vmem>>, vector<1x1x16x16xf32>
    %182 = vector.shape_cast %181 : vector<1x1x16x16xf32> to vector<16x16xf32>
    %183 = vector.broadcast %177 : vector<1x1xf32> to vector<16x16xf32>
    %184 = arith.mulf %183, %139 : vector<16x16xf32>
    %185 = vector.broadcast %179 : vector<1x1xf32> to vector<16x16xf32>
    %186 = arith.addf %184, %185 : vector<16x16xf32>
    %cst_80 = arith.constant 0.000000e+00 : f32
    %187 = vector.broadcast %cst_80 : f32 to vector<16x16xf32>
    %188 = arith.maximumf %186, %187 : vector<16x16xf32>
    %189 = arith.addf %188, %182 : vector<16x16xf32>
    %c0_81 = arith.constant 0 : index
    %190 = arith.index_cast %c2_i32_74 : i32 to index
    %c0_82 = arith.constant 0 : index
    %c0_83 = arith.constant 0 : index
    %191 = vector.load %arg7[%c0_81, %190, %c0_82, %c0_83] : memref<1x4x16x16xf32, #tpu.memory_space<vmem>>, vector<1x1x16x16xf32>
    %192 = vector.shape_cast %191 : vector<1x1x16x16xf32> to vector<16x16xf32>
    %193 = vector.shape_cast %189 : vector<16x16xf32> to vector<1x1x16x16xf32>
    tpu.vector_store %arg7[%c0_81, %190, %c0_82, %c0_83], %193 {strides = array<i32>} : memref<1x4x16x16xf32, #tpu.memory_space<vmem>>, vector<1x1x16x16xf32>,
    %c3_i32_84 = arith.constant 3 : i32
    %194 = arith.index_cast %c3_i32_84 : i32 to index
    %c0_85 = arith.constant 0 : index
    %195 = vector.load %arg8[%194, %c0_85] : memref<4x1xf32, #tpu.memory_space<vmem>>, vector<1x1xf32>
    %196 = arith.index_cast %c3_i32_84 : i32 to index
    %c0_86 = arith.constant 0 : index
    %197 = vector.load %arg3[%196, %c0_86] : memref<4x1xf32, #tpu.memory_space<vmem>>, vector<1x1xf32>
    %c0_87 = arith.constant 0 : index
    %198 = arith.index_cast %c3_i32_84 : i32 to index
    %c0_88 = arith.constant 0 : index
    %c0_89 = arith.constant 0 : index
    %199 = vector.load %arg1[%c0_87, %198, %c0_88, %c0_89] : memref<1x4x16x16xf32, #tpu.memory_space<vmem>>, vector<1x1x16x16xf32>
    %200 = vector.shape_cast %199 : vector<1x1x16x16xf32> to vector<16x16xf32>
    %201 = vector.broadcast %195 : vector<1x1xf32> to vector<16x16xf32>
    %202 = arith.mulf %201, %139 : vector<16x16xf32>
    %203 = vector.broadcast %197 : vector<1x1xf32> to vector<16x16xf32>
    %204 = arith.addf %202, %203 : vector<16x16xf32>
    %cst_90 = arith.constant 0.000000e+00 : f32
    %205 = vector.broadcast %cst_90 : f32 to vector<16x16xf32>
    %206 = arith.maximumf %204, %205 : vector<16x16xf32>
    %207 = arith.addf %206, %200 : vector<16x16xf32>
    %c0_91 = arith.constant 0 : index
    %208 = arith.index_cast %c3_i32_84 : i32 to index
    %c0_92 = arith.constant 0 : index
    %c0_93 = arith.constant 0 : index
    %209 = vector.load %arg7[%c0_91, %208, %c0_92, %c0_93] : memref<1x4x16x16xf32, #tpu.memory_space<vmem>>, vector<1x1x16x16xf32>
    %210 = vector.shape_cast %209 : vector<1x1x16x16xf32> to vector<16x16xf32>
    %211 = vector.shape_cast %207 : vector<16x16xf32> to vector<1x1x16x16xf32>
    tpu.vector_store %arg7[%c0_91, %208, %c0_92, %c0_93], %211 {strides = array<i32>} : memref<1x4x16x16xf32, #tpu.memory_space<vmem>>, vector<1x1x16x16xf32>,
    %c4_i32_94 = arith.constant 4 : i32
    return
  }
  func.func @transform_0(%arg0: i32) -> (i32, i32, i32, i32) {
    %c0_i32 = arith.constant 0 : i32
    %c0_i32_0 = arith.constant 0 : i32
    %c0_i32_1 = arith.constant 0 : i32
    %c0_i32_2 = arith.constant 0 : i32
    return %arg0, %c0_i32, %c0_i32_0, %c0_i32_1 : i32, i32, i32, i32
  }
  func.func @transform_1(%arg0: i32) -> (i32, i32) {
    %c0_i32 = arith.constant 0 : i32
    %c0_i32_0 = arith.constant 0 : i32
    %c0_i32_1 = arith.constant 0 : i32
    return %c0_i32, %c0_i32_0 : i32, i32
  }
  func.func @transform_2(%arg0: i32) -> (i32, i32) {
    %c0_i32 = arith.constant 0 : i32
    %c0_i32_0 = arith.constant 0 : i32
    %c0_i32_1 = arith.constant 0 : i32
    return %c0_i32, %c0_i32_0 : i32, i32
  }
  func.func @transform_3(%arg0: i32) -> (i32, i32) {
    %c0_i32 = arith.constant 0 : i32
    %c0_i32_0 = arith.constant 0 : i32
    %c0_i32_1 = arith.constant 0 : i32
    return %c0_i32, %c0_i32_0 : i32, i32
  }
  func.func @transform_4(%arg0: i32) -> i32 {
    %c0_i32 = arith.constant 0 : i32
    %c0_i32_0 = arith.constant 0 : i32
    return %c0_i32 : i32
  }
  func.func @transform_5(%arg0: i32) -> i32 {
    %c0_i32 = arith.constant 0 : i32
    %c0_i32_0 = arith.constant 0 : i32
    return %c0_i32 : i32
  }
  func.func @transform_6(%arg0: i32) -> (i32, i32, i32, i32) {
    %c0_i32 = arith.constant 0 : i32
    %c0_i32_0 = arith.constant 0 : i32
    %c0_i32_1 = arith.constant 0 : i32
    %c0_i32_2 = arith.constant 0 : i32
    return %arg0, %c0_i32, %c0_i32_0, %c0_i32_1 : i32, i32, i32, i32
  }
}

</mosaic_0001>

<llo_original>
// kernel: ta_forward.1
$region0: #{ta_forward.1}
  #allocation0 [shape = 'u32[]', space=smem, size = 0x4, offset = 0x4, fixed_abs, tag = 'smem constant byte address 0x4 - core index']
  #allocation1 [shape = 'u32[144,128]{1,0:T(1,128)}', space=vmem, size = 0x12000, scoped, tag = 'internal scratch']
  #allocation2 [shape = 'f32[4,1]{1,0:T(4,128)}', space=vmem, size = 0x800, scoped, tag = 'scratch operand']
  #allocation3 [shape = 'f32[1]{0:T(128)S(6)}', space=smem, size = 0x200, scoped, tag = 'scoped memory for ta_forward.1']
  #allocation4 [shape = 'f32[1]{0:T(128)S(6)}', space=smem, size = 0x200, scoped, tag = 'scoped memory for ta_forward.1']
  %s0 = inlined_call_operand.hbm [shape: f32[2,4,16,16], index: 0, kind: input, shape index: {}]
  %s1 = inlined_call_operand.vmem [shape: f32[4,4], index: 1, kind: input, shape index: {}]
  %s2 = inlined_call_operand.vmem [shape: f32[4,1], index: 2, kind: input, shape index: {}]
  %s3 = inlined_call_operand.vmem [shape: f32[4,1], index: 3, kind: input, shape index: {}]
  %s4 = inlined_call_operand.<no memory space> [shape: f32[1], index: 4, kind: input, shape index: {}]
  %s5 = inlined_call_operand.<no memory space> [shape: f32[1], index: 5, kind: input, shape index: {}]
  %s6 = inlined_call_operand.hbm [shape: f32[2,4,16,16], index: 6, kind: output, shape index: {}]
  %s7 = sld [smem:[#allocation0]]
  $region61: #{ta_forward.1} parent=0
    _
  %s9 = ssub.s32 1, %s7
  %s10 = scalar_select 0, %s9, %s7
  %11 = sst [smem:[#allocation3]] %s4
  %12 = sst [smem:[#allocation4]] %s5
  $region1: #{ta_forward.1} parent=0
    #allocation5 [shape = 'u8[65536]{0}', space=vmem, size = 0x10000, scoped, tag = 'input window, operand 0']
    #allocation6 [shape = 's32[2]{0}', space=sflag, size = 0x8, scoped, tag = 'scoped memory for ta_forward.1']
    #allocation7 [shape = 's32[2]{0}', space=sflag, size = 0x8, scoped, tag = 'scoped memory for ta_forward.1']
    #allocation8 [shape = 'u8[65536]{0}', space=vmem, size = 0x10000, scoped, tag = 'output window, operand 0']
    %13 = vsyncpa [#allocation6], 0
    %s14 = scalar_lea.sflag [#allocation6], 1
    %15 = vsyncpa %s14, 0
    %16 = vsyncpa [#allocation7], 0
    %s17 = scalar_lea.sflag [#allocation7], 1
    %18 = vsyncpa %s17, 0
    loop: start=0, step=1, limit=4
    $region2: #{ta_forward.1} parent=1 // loop_pre_header
      _
    $region3: #{ta_forward.1} parent=1 // loop_header
      %s20 = sphi 0, %s24
      %p21 = scmp.ge.s32.totalorder %s20, 4
      %s30 = sphi 0, %s32
      %s33 = sphi 0, %s30
      %s34 = sphi 0, %s33
      %s50 = sphi 0, %s34
      %s54 = sphi 0, %s54
      %s56 = sphi 0, %s54
      %s57 = sphi 0, %s56
      %s71 = sphi 0, %s57
      %s75 = sphi 0, %s75
      %s77 = sphi 0, %s75
      %s78 = sphi 0, %s77
      %s92 = sphi 0, %s78
      %s96 = sphi 0, %s96
      %s98 = sphi 0, %s96
      %s99 = sphi 0, %s98
      %s113 = sphi 0, %s99
      %s117 = sphi 0, %s117
      %s119 = sphi 0, %s117
      %s120 = sphi 0, %s119
      %s134 = sphi 0, %s120
      %s138 = sphi 0, %s138
      %s140 = sphi 0, %s138
      %s141 = sphi 0, %s140
      %s155 = sphi 0, %s141
      %s161 = sphi 0, %s163
      %s164 = sphi 0, %s161
      %s165 = sphi 0, %s164
      %s181 = sphi 0, %s165
    $region4: #{ta_forward.1} parent=1 // loop_header_branch
      %23 = sbr.rel (%p21) target = $region8
    $region5: #{ta_forward.1} parent=1 // loop_body
      %s25 = ssub.s32 %s20, 1
      %s26 = ssub.s32 %s20, 2
      %s27 = sadd.s32 %s20, 1
      %s28 = ssub.s32 %s20, %s27
      %p29 = scmp.eq.s32.totalorder %s28, 0
      %s31 = sadd.s32 %s30, 1
      %s32 = scalar_select %p29, %s30, %s31
      %p35 = pneg %p29
      %p36 = scmp.eq.s32.totalorder %s20, 1
      %p37 = por %p35, %p36
      %p38 = scmp.ne.s32.totalorder %s30, %s33
      %p39 = scmp.eq.s32.totalorder %s20, 0
      %p40 = por %p38, %p39
      %p41 = scmp.ne.s32.totalorder %s30, %s33
      %p42 = scmp.eq.s32.totalorder %s25, 1
      %p43 = por %p41, %p42
      %p44 = scmp.ne.s32.totalorder %s33, %s34
      %p45 = scmp.eq.s32.totalorder %s25, 0
      %p46 = por %p44, %p45
      %p47 = scmp.ne.s32.totalorder %s33, %s34
      %p48 = scmp.eq.s32.totalorder %s26, 1
      %p49 = por %p47, %p48
      %p51 = scmp.ne.s32.totalorder %s34, %s50
      %p52 = scmp.eq.s32.totalorder %s26, 0
      %p53 = por %p51, %p52
      %s55 = sadd.s32 %s54, 1
      %p58 = scmp.eq.s32.totalorder %s20, 1
      %p59 = scmp.ne.s32.totalorder %s54, %s56
      %p60 = scmp.eq.s32.totalorder %s20, 0
      %p61 = por %p59, %p60
      %p62 = scmp.ne.s32.totalorder %s54, %s56
      %p63 = scmp.eq.s32.totalorder %s25, 1
      %p64 = por %p62, %p63
      %p65 = scmp.ne.s32.totalorder %s56, %s57
      %p66 = scmp.eq.s32.totalorder %s25, 0
      %p67 = por %p65, %p66
      %p68 = scmp.ne.s32.totalorder %s56, %s57
      %p69 = scmp.eq.s32.totalorder %s26, 1
      %p70 = por %p68, %p69
      %p72 = scmp.ne.s32.totalorder %s57, %s71
      %p73 = scmp.eq.s32.totalorder %s26, 0
      %p74 = por %p72, %p73
      %s76 = sadd.s32 %s75, 1
      %p79 = scmp.eq.s32.totalorder %s20, 1
      %p80 = scmp.ne.s32.totalorder %s75, %s77
      %p81 = scmp.eq.s32.totalorder %s20, 0
      %p82 = por %p80, %p81
      %p83 = scmp.ne.s32.totalorder %s75, %s77
      %p84 = scmp.eq.s32.totalorder %s25, 1
      %p85 = por %p83, %p84
      %p86 = scmp.ne.s32.totalorder %s77, %s78
      %p87 = scmp.eq.s32.totalorder %s25, 0
      %p88 = por %p86, %p87
      %p89 = scmp.ne.s32.totalorder %s77, %s78
      %p90 = scmp.eq.s32.totalorder %s26, 1
      %p91 = por %p89, %p90
      %p93 = scmp.ne.s32.totalorder %s78, %s92
      %p94 = scmp.eq.s32.totalorder %s26, 0
      %p95 = por %p93, %p94
      %s97 = sadd.s32 %s96, 1
      %p100 = scmp.eq.s32.totalorder %s20, 1
      %p101 = scmp.ne.s32.totalorder %s96, %s98
      %p102 = scmp.eq.s32.totalorder %s20, 0
      %p103 = por %p101, %p102
      %p104 = scmp.ne.s32.totalorder %s96, %s98
      %p105 = scmp.eq.s32.totalorder %s25, 1
      %p106 = por %p104, %p105
      %p107 = scmp.ne.s32.totalorder %s98, %s99
      %p108 = scmp.eq.s32.totalorder %s25, 0
      %p109 = por %p107, %p108
      %p110 = scmp.ne.s32.totalorder %s98, %s99
      %p111 = scmp.eq.s32.totalorder %s26, 1
      %p112 = por %p110, %p111
      %p114 = scmp.ne.s32.totalorder %s99, %s113
      %p115 = scmp.eq.s32.totalorder %s26, 0
      %p116 = por %p114, %p115
      %s118 = sadd.s32 %s117, 1
      %p121 = scmp.eq.s32.totalorder %s20, 1
      %p122 = scmp.ne.s32.totalorder %s117, %s119
      %p123 = scmp.eq.s32.totalorder %s20, 0
      %p124 = por %p122, %p123
      %p125 = scmp.ne.s32.totalorder %s117, %s119
      %p126 = scmp.eq.s32.totalorder %s25, 1
      %p127 = por %p125, %p126
      %p128 = scmp.ne.s32.totalorder %s119, %s120
      %p129 = scmp.eq.s32.totalorder %s25, 0
      %p130 = por %p128, %p129
      %p131 = scmp.ne.s32.totalorder %s119, %s120
      %p132 = scmp.eq.s32.totalorder %s26, 1
      %p133 = por %p131, %p132
      %p135 = scmp.ne.s32.totalorder %s120, %s134
      %p136 = scmp.eq.s32.totalorder %s26, 0
      %p137 = por %p135, %p136
      %s139 = sadd.s32 %s138, 1
      %p142 = scmp.eq.s32.totalorder %s20, 1
      %p143 = scmp.ne.s32.totalorder %s138, %s140
      %p144 = scmp.eq.s32.totalorder %s20, 0
      %p145 = por %p143, %p144
      %p146 = scmp.ne.s32.totalorder %s138, %s140
      %p147 = scmp.eq.s32.totalorder %s25, 1
      %p148 = por %p146, %p147
      %p149 = scmp.ne.s32.totalorder %s140, %s141
      %p150 = scmp.eq.s32.totalorder %s25, 0
      %p151 = por %p149, %p150
      %p152 = scmp.ne.s32.totalorder %s140, %s141
      %p153 = scmp.eq.s32.totalorder %s26, 1
      %p154 = por %p152, %p153
      %p156 = scmp.ne.s32.totalorder %s141, %s155
      %p157 = scmp.eq.s32.totalorder %s26, 0
      %p158 = por %p156, %p157
      %s159 = ssub.s32 %s20, %s27
      %p160 = scmp.eq.s32.totalorder %s159, 0
      %s162 = sadd.s32 %s161, 1
      %s163 = scalar_select %p160, %s161, %s162
      %p166 = pneg %p160
      %p167 = scmp.eq.s32.totalorder %s20, 1
      %p168 = por %p166, %p167
      %p169 = scmp.ne.s32.totalorder %s161, %s164
      %p170 = scmp.eq.s32.totalorder %s20, 0
      %p171 = por %p169, %p170
      %p172 = scmp.ne.s32.totalorder %s161, %s164
      %p173 = scmp.eq.s32.totalorder %s25, 1
      %p174 = por %p172, %p173
      %p175 = scmp.ne.s32.totalorder %s164, %s165
      %p176 = scmp.eq.s32.totalorder %s25, 0
      %p177 = por %p175, %p176
      %p178 = scmp.ne.s32.totalorder %s164, %s165
      %p179 = scmp.eq.s32.totalorder %s26, 1
      %p180 = por %p178, %p179
      %p182 = scmp.ne.s32.totalorder %s165, %s181
      %p183 = scmp.eq.s32.totalorder %s26, 0
      %p184 = por %p182, %p183
      %p185 = scmp.le.s32.totalorder 1, %s20
      %p186 = scmp.lt.s32.totalorder %s20, 3
      %p187 = pnand %p185, %p186
      %p188 = pneg %p187
      // Predicated region
      $region9: #{ta_forward.1} parent=5 // pred_check
        _
      $region10: #{ta_forward.1} parent=5 // pred_check_branch
        %190 = sbr.rel (%p187) target = $region12
      $region11: #{ta_forward.1} parent=5 // pred_region
        %s191 = ssub.s32 %s20, 1
        // Predicated region
        $region13: #{ta_forward.1} parent=11 // pred_check
          %p192 = pneg %p67
        $region14: #{ta_forward.1} parent=11 // pred_check_branch
          %194 = sbr.rel (%p192) target = $region16
        $region15: #{ta_forward.1} parent=11 // pred_region
          _
        $region16: #{ta_forward.1} parent=11 // pred_fallthru
          _
        // Predicated region
        $region17: #{ta_forward.1} parent=11 // pred_check
          %p195 = pneg %p88
        $region18: #{ta_forward.1} parent=11 // pred_check_branch
          %197 = sbr.rel (%p195) target = $region20
        $region19: #{ta_forward.1} parent=11 // pred_region
          _
        $region20: #{ta_forward.1} parent=11 // pred_fallthru
          _
        // Predicated region
        $region21: #{ta_forward.1} parent=11 // pred_check
          %p198 = pneg %p109
        $region22: #{ta_forward.1} parent=11 // pred_check_branch
          %200 = sbr.rel (%p198) target = $region24
        $region23: #{ta_forward.1} parent=11 // pred_region
          _
        $region24: #{ta_forward.1} parent=11 // pred_fallthru
          _
        // Predicated region
        $region25: #{ta_forward.1} parent=11 // pred_check
          %p201 = pneg %p130
        $region26: #{ta_forward.1} parent=11 // pred_check_branch
          %203 = sbr.rel (%p201) target = $region28
        $region27: #{ta_forward.1} parent=11 // pred_region
          _
        $region28: #{ta_forward.1} parent=11 // pred_fallthru
          _
        // Predicated region
        $region29: #{ta_forward.1} parent=11 // pred_check
          %p204 = pneg %p151
        $region30: #{ta_forward.1} parent=11 // pred_check_branch
          %206 = sbr.rel (%p204) target = $region32
        $region31: #{ta_forward.1} parent=11 // pred_region
          _
        $region32: #{ta_forward.1} parent=11 // pred_fallthru
          _
      $region12: #{ta_forward.1} parent=5 // pred_fallthru
        _
      %p207 = scmp.lt.s32.totalorder %s20, 2
      // Predicated region
      $region33: #{ta_forward.1} parent=5 // pred_check
        %p208 = pneg %p207
      $region34: #{ta_forward.1} parent=5 // pred_check_branch
        %210 = sbr.rel (%p208) target = $region36
      $region35: #{ta_forward.1} parent=5 // pred_region
        // Predicated region
        $region37: #{ta_forward.1} parent=35 // pred_check
          %p211 = pneg %p40
        $region38: #{ta_forward.1} parent=35 // pred_check_branch
          %213 = sbr.rel (%p211) target = $region40
        $region39: #{ta_forward.1} parent=35 // pred_region
          %s214 = sand.u32 %s30, 1
          %s215 = scalar_lea.sflag [#allocation6], %s214
          %s216 = sand.u32 %s30, 1
          %s217 = smul.addr %s216, 64
          %s218 = scalar_lea.vmem [#allocation5], %s217
          %s220 = ssub.s32 1024, 1024
          %221 = vsyncadd %s215, %s220
          %s222 = smul.addr %s20, 8
          %s223 = smul.addr %s222, 128
          %s224 = scalar_lea.hbm %s0, %s223
          %s225 = sshll.u32 %s218, 4
          %s226 = int_to_ptr.vmem [resolvable:$true] %s225
          %231 = dma.hbm_to_vmem [thread:$0]  %s224, 1024, %s226, %s215, 128, 128, 8
        $region40: #{ta_forward.1} parent=35 // pred_fallthru
          _
      $region36: #{ta_forward.1} parent=5 // pred_fallthru
        _
      %p232 = scmp.le.s32.totalorder 1, %s20
      %p233 = scmp.lt.s32.totalorder %s20, 3
      %p234 = pnand %p232, %p233
      %p235 = pneg %p234
      // Predicated region
      $region41: #{ta_forward.1} parent=5 // pred_check
        _
      $region42: #{ta_forward.1} parent=5 // pred_check_branch
        %237 = sbr.rel (%p234) target = $region44
      $region43: #{ta_forward.1} parent=5 // pred_region
        %s238 = ssub.s32 %s20, 1
        %s239 = sand.u32 %s33, 1
        %s240 = scalar_lea.sflag [#allocation6], %s239
        %s241 = sand.u32 %s33, 1
        %s242 = smul.addr %s241, 64
        %s243 = scalar_lea.vmem [#allocation5], %s242
        // Predicated region
        $region45: #{ta_forward.1} parent=43 // pred_check
          %p244 = pneg %p46
        $region46: #{ta_forward.1} parent=43 // pred_check_branch
          %246 = sbr.rel (%p244) target = $region48
        $region47: #{ta_forward.1} parent=43 // pred_region
          %247 = dma.done %s240, 1024
        $region48: #{ta_forward.1} parent=43 // pred_fallthru
          _
        %s248 = sand.u32 %s33, 1
        %s249 = scalar_lea.sflag [#allocation6], %s248
        %s250 = sand.u32 %s33, 1
        %s251 = smul.addr %s250, 64
        %s252 = scalar_lea.vmem [#allocation5], %s251
        %p253 = pneg %p46
        %p254 = pneg %p43
        %p255 = pneg %p67
        %p256 = pneg %p64
        %p257 = pneg %p88
        %p258 = pneg %p85
        %p259 = pneg %p109
        %p260 = pneg %p106
        %p261 = pneg %p130
        %p262 = pneg %p127
        %p263 = pneg %p151
        %p264 = pneg %p148
        %p265 = pneg %p177
        %p266 = pneg %p174
        %s267 = sand.u32 %s164, 1
        %s268 = scalar_lea.sflag [#allocation7], %s267
        %s269 = sand.u32 %s164, 1
        %s270 = smul.addr %s269, 64
        %s271 = scalar_lea.vmem [#allocation8], %s270
        %s272 = sld [smem:[#allocation3]]
        %s273 = sld [smem:[#allocation4]]
        %v274 = vld [vmem:[%s243] sm:$0xff]
        %v275 = vld [vmem:[%s243 + $0x8] sm:$0xff]
        %v276 = vld [vmem:[%s3] sm:$0x1]
        %s278 = vtos %v276
        %v279 = vstv %s278
        %v281 = vmul.f32 %v274, %v279
        %v282 = vmul.f32 %v275, %v279
        %v283 = vadd.f32 %v281, 0.0
        %v284 = vadd.f32 %v282, 0.0
        %vm285 = vcmask 130048
        %v286 = vsel %vm285, %v274, 0.0
        %287 = vadd.xlane.f32.xlu0 %v286
        %v288 = vpop.xlane.xlu0 %287
        %v289 = vsel %vm285, %v275, 0.0
        %290 = vadd.xlane.f32.xlu0 %v289
        %v291 = vpop.xlane.xlu0 %290
        %v292 = vadd.f32 %v288, %v291
        %v293 = vrot.slane %v292, 4
        %v294 = vadd.f32 %v292, %v293
        %v295 = vrot.slane %v294, 2
        %v296 = vadd.f32 %v294, %v295
        %v297 = vrot.slane %v296, 1
        %v298 = vadd.f32 %v296, %v297
        %v299 = vmul.f32 %v298, 0.00390625
        %v300 = vlaneseq
        %v301 = vshrl.u32 %v300, 7
        %vm302 = vcmp.eq.s32.totalorder %v301, 0
        %v303 = vsel %vm302, %v299, 0.0
        %v304 = vadd.f32 %v303, 0.0
        %s305 = scalar_lea.vmem %s243, 16 [#allocation5]
        %v306 = vld [vmem:[%s305] sm:$0xff]
        %v307 = vld [vmem:[%s305 + $0x8] sm:$0xff]
        %v308 = vld [vmem:[%s3 + $0x1] sm:$0x1]
        %s310 = vtos %v308
        %v311 = vstv %s310
        %v313 = vmul.f32 %v306, %v311
        %v314 = vmul.f32 %v307, %v311
        %v315 = vadd.f32 %v283, %v313
        %v316 = vadd.f32 %v284, %v314
        %v317 = vsel %vm285, %v306, 0.0
        %318 = vadd.xlane.f32.xlu0 %v317
        %v319 = vpop.xlane.xlu0 %318
        %v320 = vsel %vm285, %v307, 0.0
        %321 = vadd.xlane.f32.xlu0 %v320
        %v322 = vpop.xlane.xlu0 %321
        %v323 = vadd.f32 %v319, %v322
        %v324 = vrot.slane %v323, 4
        %v325 = vadd.f32 %v323, %v324
        %v326 = vrot.slane %v325, 2
        %v327 = vadd.f32 %v325, %v326
        %v328 = vrot.slane %v327, 1
        %v329 = vadd.f32 %v327, %v328
        %v330 = vmul.f32 %v329, 0.00390625
        %vm331 = vcmp.eq.s32.totalorder %v301, 1
        %v332 = vsel %vm331, %v330, 0.0
        %v333 = vadd.f32 %v304, %v332
        %s334 = scalar_lea.vmem %s243, 32 [#allocation5]
        %v335 = vld [vmem:[%s334] sm:$0xff]
        %v336 = vld [vmem:[%s334 + $0x8] sm:$0xff]
        %v337 = vld [vmem:[%s3 + $0x2] sm:$0x1]
        %s339 = vtos %v337
        %v340 = vstv %s339
        %v342 = vmul.f32 %v335, %v340
        %v343 = vmul.f32 %v336, %v340
        %v344 = vadd.f32 %v315, %v342
        %v345 = vadd.f32 %v316, %v343
        %v346 = vsel %vm285, %v335, 0.0
        %347 = vadd.xlane.f32.xlu0 %v346
        %v348 = vpop.xlane.xlu0 %347
        %v349 = vsel %vm285, %v336, 0.0
        %350 = vadd.xlane.f32.xlu0 %v349
        %v351 = vpop.xlane.xlu0 %350
        %v352 = vadd.f32 %v348, %v351
        %v353 = vrot.slane %v352, 4
        %v354 = vadd.f32 %v352, %v353
        %v355 = vrot.slane %v354, 2
        %v356 = vadd.f32 %v354, %v355
        %v357 = vrot.slane %v356, 1
        %v358 = vadd.f32 %v356, %v357
        %v359 = vmul.f32 %v358, 0.00390625
        %vm360 = vcmp.eq.s32.totalorder %v301, 2
        %v361 = vsel %vm360, %v359, 0.0
        %v362 = vadd.f32 %v333, %v361
        %s363 = scalar_lea.vmem %s243, 48 [#allocation5]
        %v364 = vld [vmem:[%s363] sm:$0xff]
        %v365 = vld [vmem:[%s363 + $0x8] sm:$0xff]
        %v366 = vld [vmem:[%s3 + $0x3] sm:$0x1]
        %s368 = vtos %v366
        %v369 = vstv %s368
        %v371 = vmul.f32 %v364, %v369
        %v372 = vmul.f32 %v365, %v369
        %v373 = vadd.f32 %v344, %v371
        %v374 = vadd.f32 %v345, %v372
        %v375 = vsel %vm285, %v364, 0.0
        %376 = vadd.xlane.f32.xlu0 %v375
        %v377 = vpop.xlane.xlu0 %376
        %v378 = vsel %vm285, %v365, 0.0
        %379 = vadd.xlane.f32.xlu0 %v378
        %v380 = vpop.xlane.xlu0 %379
        %v381 = vadd.f32 %v377, %v380
        %v382 = vrot.slane %v381, 4
        %v383 = vadd.f32 %v381, %v382
        %v384 = vrot.slane %v383, 2
        %v385 = vadd.f32 %v383, %v384
        %v386 = vrot.slane %v385, 1
        %v387 = vadd.f32 %v385, %v386
        %v388 = vmul.f32 %v387, 0.00390625
        %vm389 = vcmp.eq.s32.totalorder %v301, 3
        %v390 = vsel %vm389, %v388, 0.0
        %v391 = vadd.f32 %v362, %v390
        %v392 = vstv %s272
        %v393 = vadd.f32 %v373, %v392
        %v394 = vadd.f32 %v374, %v392
        %v395 = vld [vmem:[%s1] sm:$0xf]
        %v396 = vld [vmem:[%s2] sm:$0xf]
        %vm397 = vcmask 31744
        %v399 = vsel %vm397, %v395, 0
        %vm401 = vcmask 1043456
        %v403 = vsel %vm401, %v391, 0
        %405 = vmatprep.subr.mxu0 0.0
        %406 = vmatpush1.msra.mxu0 0.0
        %407 = vmatprep.subr.mxu0 0.0
        %408 = vmatpush1.msra.mxu0 0.0
        %409 = vmatprep.subr.mxu0 0.0
        %410 = vmatpush1.msra.mxu0 0.0
        %411 = vmatprep.subr.mxu0 0.0
        %412 = vmatpush1.msra.mxu0 0.0
        %413 = vmatprep.subr.mxu0 0.0
        %414 = vmatpush1.msra.mxu0 0.0
        %415 = vmatprep.subr.mxu0 0.0
        %416 = vmatpush1.msra.mxu0 0.0
        %417 = vmatprep.subr.mxu0 0.0
        %418 = vmatpush1.msra.mxu0 0.0
        %419 = vmatprep.subr.mxu0 0.0
        %420 = vmatpush1.msra.mxu0 0.0
        %421 = vmatprep.subr.mxu0 0.0
        %422 = vmatpush1.msra.mxu0 0.0
        %423 = vmatprep.subr.mxu0 0.0
        %424 = vmatpush1.msra.mxu0 0.0
        %425 = vmatprep.subr.mxu0 0.0
        %426 = vmatpush1.msra.mxu0 0.0
        %427 = vmatprep.subr.mxu0 0.0
        %428 = vmatpush1.msra.mxu0 0.0
        %429 = vmatprep.subr.mxu0 0.0
        %430 = vmatpush1.msra.mxu0 0.0
        %431 = vmatprep.subr.mxu0 0.0
        %432 = vmatpush1.msra.mxu0 0.0
        %433 = vmatprep.subr.mxu0 0.0
        %434 = vmatpush1.msra.mxu0 0.0
        %435 = vmatprep.subr.mxu0 0.0
        %436 = vmatpush1.msra.mxu0 %v403
        %437 = vmatprep.subr.mxu0 0.0
        %438 = vmatpush2.msra.mxu0 0.0
        %439 = vmatprep.subr.mxu0 0.0
        %440 = vmatpush2.msra.mxu0 0.0
        %441 = vmatprep.subr.mxu0 0.0
        %442 = vmatpush2.msra.mxu0 0.0
        %443 = vmatprep.subr.mxu0 0.0
        %444 = vmatpush2.msra.mxu0 0.0
        %445 = vmatprep.subr.mxu0 0.0
        %446 = vmatpush2.msra.mxu0 0.0
        %447 = vmatprep.subr.mxu0 0.0
        %448 = vmatpush2.msra.mxu0 0.0
        %449 = vmatprep.subr.mxu0 0.0
        %450 = vmatpush2.msra.mxu0 0.0
        %451 = vmatprep.subr.mxu0 0.0
        %452 = vmatpush2.msra.mxu0 0.0
        %453 = vmatprep.subr.mxu0 0.0
        %454 = vmatpush2.msra.mxu0 0.0
        %455 = vmatprep.subr.mxu0 0.0
        %456 = vmatpush2.msra.mxu0 0.0
        %457 = vmatprep.subr.mxu0 0.0
        %458 = vmatpush2.msra.mxu0 0.0
        %459 = vmatprep.subr.mxu0 0.0
        %460 = vmatpush2.msra.mxu0 0.0
        %461 = vmatprep.subr.mxu0 0.0
        %462 = vmatpush2.msra.mxu0 0.0
        %463 = vmatprep.subr.mxu0 0.0
        %464 = vmatpush2.msra.mxu0 0.0
        %465 = vmatprep.subr.mxu0 0.0
        %466 = vmatpush2.msra.mxu0 0.0
        %467 = vmatprep.subr.mxu0 0.0
        %468 = vmatpush2.msra.mxu0 0.0
        %469 = vmatprep.mubr.f32.mxu0 0.0
        %470 = vmatmul.mubr.f32.gmra.mxu0 %v399
        %v471 = vpop.f32.mrf.mxu0
        %v472 = vadd.f32 %v396, %v471
        %v473 = vpop.f32.mrf.mxu0
        %474 = vdwg.mxu0
        %v475 = vsub.f32 %v391, %v472
        %v476 = vsub.f32 0.0, %v475
        %v477 = vmul.f32 %v476, 1.442695
        %v478 = vpow.pop %v477
        %v479 = vadd.f32 %v478, 1.0
        %v480 = vrcp.pop %v479
        %v481 = vmul.f32 1.0, %v480
        %v482 = vmul.f32 %v481, %v391
        %v484 = vsel %vm401, %v482, 0
        %486 = vmatprep.subr.mxu0 0.0
        %487 = vmatpush1.msra.mxu0 0.0
        %488 = vmatprep.subr.mxu0 0.0
        %489 = vmatpush1.msra.mxu0 0.0
        %490 = vmatprep.subr.mxu0 0.0
        %491 = vmatpush1.msra.mxu0 0.0
        %492 = vmatprep.subr.mxu0 0.0
        %493 = vmatpush1.msra.mxu0 0.0
        %494 = vmatprep.subr.mxu0 0.0
        %495 = vmatpush1.msra.mxu0 0.0
        %496 = vmatprep.subr.mxu0 0.0
        %497 = vmatpush1.msra.mxu0 0.0
        %498 = vmatprep.subr.mxu0 0.0
        %499 = vmatpush1.msra.mxu0 0.0
        %500 = vmatprep.subr.mxu0 0.0
        %501 = vmatpush1.msra.mxu0 0.0
        %502 = vmatprep.subr.mxu0 0.0
        %503 = vmatpush1.msra.mxu0 0.0
        %504 = vmatprep.subr.mxu0 0.0
        %505 = vmatpush1.msra.mxu0 0.0
        %506 = vmatprep.subr.mxu0 0.0
        %507 = vmatpush1.msra.mxu0 0.0
        %508 = vmatprep.subr.mxu0 0.0
        %509 = vmatpush1.msra.mxu0 0.0
        %510 = vmatprep.subr.mxu0 0.0
        %511 = vmatpush1.msra.mxu0 0.0
        %512 = vmatprep.subr.mxu0 0.0
        %513 = vmatpush1.msra.mxu0 0.0
        %514 = vmatprep.subr.mxu0 0.0
        %515 = vmatpush1.msra.mxu0 0.0
        %516 = vmatprep.subr.mxu0 0.0
        %517 = vmatpush1.msra.mxu0 %v484
        %518 = vmatprep.subr.mxu0 0.0
        %519 = vmatpush2.msra.mxu0 0.0
        %520 = vmatprep.subr.mxu0 0.0
        %521 = vmatpush2.msra.mxu0 0.0
        %522 = vmatprep.subr.mxu0 0.0
        %523 = vmatpush2.msra.mxu0 0.0
        %524 = vmatprep.subr.mxu0 0.0
        %525 = vmatpush2.msra.mxu0 0.0
        %526 = vmatprep.subr.mxu0 0.0
        %527 = vmatpush2.msra.mxu0 0.0
        %528 = vmatprep.subr.mxu0 0.0
        %529 = vmatpush2.msra.mxu0 0.0
        %530 = vmatprep.subr.mxu0 0.0
        %531 = vmatpush2.msra.mxu0 0.0
        %532 = vmatprep.subr.mxu0 0.0
        %533 = vmatpush2.msra.mxu0 0.0
        %534 = vmatprep.subr.mxu0 0.0
        %535 = vmatpush2.msra.mxu0 0.0
        %536 = vmatprep.subr.mxu0 0.0
        %537 = vmatpush2.msra.mxu0 0.0
        %538 = vmatprep.subr.mxu0 0.0
        %539 = vmatpush2.msra.mxu0 0.0
        %540 = vmatprep.subr.mxu0 0.0
        %541 = vmatpush2.msra.mxu0 0.0
        %542 = vmatprep.subr.mxu0 0.0
        %543 = vmatpush2.msra.mxu0 0.0
        %544 = vmatprep.subr.mxu0 0.0
        %545 = vmatpush2.msra.mxu0 0.0
        %546 = vmatprep.subr.mxu0 0.0
        %547 = vmatpush2.msra.mxu0 0.0
        %548 = vmatprep.subr.mxu0 0.0
        %549 = vmatpush2.msra.mxu0 0.0
        %550 = vmatprep.mubr.f32.mxu0 0.0
        %551 = vmatmul.mubr.f32.gmra.mxu0 %v399
        %v552 = vpop.f32.mrf.mxu0
        %v553 = vadd.f32 0.0, %v552
        %v554 = vpop.f32.mrf.mxu0
        %555 = vdwg.mxu0
        %vm556 = vcmask 3072
        %557 = vst.msk [vmem:[#allocation2] sm:$0xf] %vm556, %v553
        %v558 = vsel %vm285, %v393, -inf
        %559 = vmax.xlane.f32.xlu0 %v558
        %v560 = vpop.xlane.xlu0 %559
        %v561 = vsel %vm285, %v394, -inf
        %562 = vmax.xlane.f32.xlu0 %v561
        %v563 = vpop.xlane.xlu0 %562
        %v564 = vmax.f32 %v558, %v561
        %v565 = vrot.slane %v564, 4
        %v566 = vmax.f32 %v564, %v565
        %v567 = vrot.slane %v566, 2
        %v568 = vmax.f32 %v566, %v567
        %v569 = vrot.slane %v568, 1
        %v570 = vmax.f32 %v568, %v569
        %v571 = vsel %vm285, %v570, -inf
        %572 = vmax.xlane.f32.xlu0 %v571
        %v573 = vpop.xlane.xlu0 %572
        %v574 = vstv %s273
        %v575 = vmul.f32 %v574, %v573
        %v576 = vsub.f32 %v560, %v575
        %v577 = vsub.f32 %v563, %v575
        %v578 = vsub.f32 0.0, %v576
        %v579 = vsub.f32 0.0, %v577
        %v580 = vmul.f32 %v578, 1.442695
        %v581 = vpow.pop %v580
        %v582 = vmul.f32 %v579, 1.442695
        %v583 = vpow.pop %v582
        %v584 = vadd.f32 %v581, 1.0
        %v585 = vadd.f32 %v583, 1.0
        %v586 = vrcp.pop %v584
        %v587 = vmul.f32 1.0, %v586
        %v588 = vrcp.pop %v585
        %v589 = vmul.f32 1.0, %v588
        %v590 = vmul.f32 %v587, %v560
        %v591 = vmul.f32 %v589, %v563
        %v592 = vsub.f32 %v570, %v575
        %v593 = vsub.f32 0.0, %v592
        %v594 = vmul.f32 %v593, 1.442695
        %v595 = vpow.pop %v594
        %v596 = vadd.f32 %v595, 1.0
        %v597 = vrcp.pop %v596
        %v598 = vmul.f32 1.0, %v597
        %v599 = vmul.f32 %v598, %v570
        %v600 = vadd.f32 %v590, %v599
        %v601 = vadd.f32 %v591, %v599
        %v602 = vld [vmem:[#allocation2] sm:$0x1]
        %v603 = vld [vmem:[%s2] sm:$0x1]
        %v604 = vld [vmem:[%s243] sm:$0xff]
        %v605 = vld [vmem:[%s243 + $0x8] sm:$0xff]
        %s607 = vtos %v602
        %v608 = vstv %s607
        %v610 = vmul.f32 %v608, %v600
        %v611 = vmul.f32 %v608, %v601
        %s613 = vtos %v603
        %v614 = vstv %s613
        %v616 = vadd.f32 %v610, %v614
        %v617 = vadd.f32 %v611, %v614
        %v618 = vmax.f32 %v616, 0.0
        %v619 = vmax.f32 %v617, 0.0
        %v620 = vadd.f32 %v618, %v604
        %v621 = vadd.f32 %v619, %v605
        %622 = vst.msk [vmem:[%s271] sm:$0xff] %vm285, %v620
        %623 = vst.msk [vmem:[%s271 + $0x8] sm:$0xff] %vm285, %v621
        %v624 = vld [vmem:[#allocation2 + $0x1] sm:$0x1]
        %v625 = vld [vmem:[%s2 + $0x1] sm:$0x1]
        %v626 = vld [vmem:[%s305] sm:$0xff]
        %v627 = vld [vmem:[%s305 + $0x8] sm:$0xff]
        %s629 = vtos %v624
        %v630 = vstv %s629
        %v632 = vmul.f32 %v630, %v600
        %v633 = vmul.f32 %v630, %v601
        %s635 = vtos %v625
        %v636 = vstv %s635
        %v638 = vadd.f32 %v632, %v636
        %v639 = vadd.f32 %v633, %v636
        %v640 = vmax.f32 %v638, 0.0
        %v641 = vmax.f32 %v639, 0.0
        %v642 = vadd.f32 %v640, %v626
        %v643 = vadd.f32 %v641, %v627
        %s644 = scalar_lea.vmem %s271, 16 [#allocation8]
        %645 = vst.msk [vmem:[%s644] sm:$0xff] %vm285, %v642
        %646 = vst.msk [vmem:[%s644 + $0x8] sm:$0xff] %vm285, %v643
        %v647 = vld [vmem:[#allocation2 + $0x2] sm:$0x1]
        %v648 = vld [vmem:[%s2 + $0x2] sm:$0x1]
        %v649 = vld [vmem:[%s334] sm:$0xff]
        %v650 = vld [vmem:[%s334 + $0x8] sm:$0xff]
        %s652 = vtos %v647
        %v653 = vstv %s652
        %v655 = vmul.f32 %v653, %v600
        %v656 = vmul.f32 %v653, %v601
        %s658 = vtos %v648
        %v659 = vstv %s658
        %v661 = vadd.f32 %v655, %v659
        %v662 = vadd.f32 %v656, %v659
        %v663 = vmax.f32 %v661, 0.0
        %v664 = vmax.f32 %v662, 0.0
        %v665 = vadd.f32 %v663, %v649
        %v666 = vadd.f32 %v664, %v650
        %s667 = scalar_lea.vmem %s271, 32 [#allocation8]
        %668 = vst.msk [vmem:[%s667] sm:$0xff] %vm285, %v665
        %669 = vst.msk [vmem:[%s667 + $0x8] sm:$0xff] %vm285, %v666
        %v670 = vld [vmem:[#allocation2 + $0x3] sm:$0x1]
        %v671 = vld [vmem:[%s2 + $0x3] sm:$0x1]
        %v672 = vld [vmem:[%s363] sm:$0xff]
        %v673 = vld [vmem:[%s363 + $0x8] sm:$0xff]
        %s675 = vtos %v670
        %v676 = vstv %s675
        %v678 = vmul.f32 %v676, %v600
        %v679 = vmul.f32 %v676, %v601
        %s681 = vtos %v671
        %v682 = vstv %s681
        %v684 = vadd.f32 %v678, %v682
        %v685 = vadd.f32 %v679, %v682
        %v686 = vmax.f32 %v684, 0.0
        %v687 = vmax.f32 %v685, 0.0
        %v688 = vadd.f32 %v686, %v672
        %v689 = vadd.f32 %v687, %v673
        %s690 = scalar_lea.vmem %s271, 48 [#allocation8]
        %691 = vst.msk [vmem:[%s690] sm:$0xff] %vm285, %v688
        %692 = vst.msk [vmem:[%s690 + $0x8] sm:$0xff] %vm285, %v689
        %s693 = sand.u32 %s164, 1
        %s694 = scalar_lea.sflag [#allocation7], %s693
        %s695 = sand.u32 %s164, 1
        %s696 = smul.addr %s695, 64
        %s697 = scalar_lea.vmem [#allocation8], %s696
        // Predicated region
        $region49: #{ta_forward.1} parent=43 // pred_check
          %p698 = pneg %p174
        $region50: #{ta_forward.1} parent=43 // pred_check_branch
          %700 = sbr.rel (%p698) target = $region52
        $region51: #{ta_forward.1} parent=43 // pred_region
          %s702 = ssub.s32 1024, 1024
          %703 = vsyncadd %s694, %s702
          %s704 = smul.addr %s25, 8
          %s705 = smul.addr %s704, 128
          %s706 = scalar_lea.hbm %s6, %s705
          %s707 = sshll.u32 %s697, 4
          %s708 = int_to_ptr.vmem [resolvable:$true] %s707
          %713 = dma.vmem_to_hbm [thread:$0]  %s708, 1024, %s706, %s694, 128, 128, 8
        $region52: #{ta_forward.1} parent=43 // pred_fallthru
          _
      $region44: #{ta_forward.1} parent=5 // pred_fallthru
        _
      %p714 = scmp.le.s32.totalorder 2, %s20
      // Predicated region
      $region53: #{ta_forward.1} parent=5 // pred_check
        %p715 = pneg %p714
      $region54: #{ta_forward.1} parent=5 // pred_check_branch
        %717 = sbr.rel (%p715) target = $region56
      $region55: #{ta_forward.1} parent=5 // pred_region
        %s718 = ssub.s32 %s20, 2
        // Predicated region
        $region57: #{ta_forward.1} parent=55 // pred_check
          %p719 = pneg %p180
        $region58: #{ta_forward.1} parent=55 // pred_check_branch
          %721 = sbr.rel (%p719) target = $region60
        $region59: #{ta_forward.1} parent=55 // pred_region
          %s722 = sand.u32 %s165, 1
          %s723 = scalar_lea.sflag [#allocation7], %s722
          %s724 = sand.u32 %s165, 1
          %s725 = smul.addr %s724, 64
          %s726 = scalar_lea.vmem [#allocation8], %s725
          %727 = dma.done %s723, 1024
        $region60: #{ta_forward.1} parent=55 // pred_fallthru
          _
      $region56: #{ta_forward.1} parent=5 // pred_fallthru
        _
    $region6: #{ta_forward.1} parent=1 // loop_footer
      %s24 = sadd.s32 1, %s20
    $region7: #{ta_forward.1} parent=1 // loop_footer_branch
      %19 = sbr.rel target = $region3
    $region8: #{ta_forward.1} parent=1 // loop_exit
      _
    %728 = vsyncpa [#allocation6], 1
    %s729 = scalar_lea.sflag [#allocation6], 1
    %730 = vsyncpa %s729, 1
    %731 = vsyncpa [#allocation7], 1
    %s732 = scalar_lea.sflag [#allocation7], 1
    %733 = vsyncpa %s732, 1

</llo_original>
